<compile_context>
chip_gen: v5e
topology: v5e:2x2
jax: 0.10.0
libtpu: 0.0.40
codegen_flags: <defaults>
</compile_context>

<pallas_src>
import jax
import jax.numpy as jnp
from jax.experimental import pallas as pl
from jax.experimental.pallas import tpu as pltpu


def bert_output_kernel(x_ref, w_ref, b_ref, res_ref, g_ref, beta_ref, o_ref):
    # x_ref:   (tm, K)   row tile of intermediate activations (native dtype)
    # w_ref:   (K, H)    dense weight, resident across the grid
    # b_ref:   (1, H)    dense bias (f32)
    # res_ref: (tm, H)   residual (input_tensor) row tile
    # g_ref:   (1, H)    LayerNorm gamma (f32)
    # beta_ref:(1, H)    LayerNorm beta  (f32)
    # o_ref:   (tm, H)   output row tile

    # Dense on the MXU: native-dtype operands, f32 accumulation.
    h = jnp.dot(x_ref[...], w_ref[...], preferred_element_type=jnp.float32)

    # TODO(synk): dropout is eval-mode identity here; training-mode dropout
    # would need pltpu.prng_random_bits masking.
    # bias + residual add (f32 elementwise)
    h = h + b_ref[...] + res_ref[...].astype(jnp.float32)

    # LayerNorm over the hidden axis, eps=1e-12, biased variance (PyTorch).
    mean = jnp.mean(h, axis=-1, keepdims=True)
    c = h - mean
    var = jnp.mean(c * c, axis=-1, keepdims=True)
    inv = jax.lax.rsqrt(var + 1e-12)
    o_ref[...] = (c * inv * g_ref[...] + beta_ref[...]).astype(o_ref.dtype)


def _round_up(x, m):
    return (x + m - 1) // m * m


def _sublanes(dt):
    bits = jnp.dtype(dt).itemsize * 8
    return max(8, 256 // bits)  # 8 for f32, 16 for bf16, 32 for int8


def bert_output(hidden_states, input_tensor, w, b, gamma, beta, *,
                tm=256, matmul_dtype=None):
    """hidden_states: [T, K], input_tensor: [T, H] -> [T, H]."""
    T, K = hidden_states.shape
    Tr, H = input_tensor.shape
    assert Tr == T and w.shape == (K, H)

    out_dtype = input_tensor.dtype

    # Optionally feed the MXU bf16 operands (f32 accumulation stays in-kernel).
    if matmul_dtype is not None:
        hidden_states = hidden_states.astype(matmul_dtype)
        w = w.astype(matmul_dtype)
    x_dt = hidden_states.dtype
    res_dt = input_tensor.dtype

    # Sublane-aligned row tile; never larger than the (rounded-up) token count.
    sub = max(_sublanes(x_dt), _sublanes(res_dt), _sublanes(out_dtype))
    tm_eff = min(_round_up(tm, sub), _round_up(T, sub))

    # VMEM budget from the chip's actual capacity (v7x: 64 MiB, v5e/v6e: 128 MiB).
    try:
        vmem_cap = int(pltpu.get_tpu_info().vmem_capacity_bytes)
    except Exception:
        vmem_cap = 128 * 1024 * 1024
    budget = min(100 * 1024 * 1024, int(0.85 * vmem_cap))

    isz = lambda dt: jnp.dtype(dt).itemsize

    def _need(tm_):
        # Streamed tiles double-buffered; constants counted double-buffered too
        # (conservative — Pallas keeps them resident but allocates buffers).
        stream = (2 * tm_ * K * isz(x_dt)
                  + 2 * tm_ * H * isz(res_dt)
                  + 2 * tm_ * H * isz(out_dtype))
        consts = 2 * (K * H * isz(w.dtype) + 3 * H * 4)
        return int(1.15 * (stream + consts)) + (2 << 20)

    # Shrink the row tile until the working set fits (relevant on v7x).
    while _need(tm_eff) > budget and tm_eff > sub:
        tm_eff = max(sub, _round_up(tm_eff // 2, sub))

    vmem_limit = min(budget, max(32 * 1024 * 1024, _need(tm_eff)))

    # Pad the token axis so the grid tiles it exactly (padded rows discarded).
    T_pad = _round_up(T, tm_eff)
    if T_pad != T:
        hidden_states = jnp.pad(hidden_states, ((0, T_pad - T), (0, 0)))
        input_tensor = jnp.pad(input_tensor, ((0, T_pad - T), (0, 0)))

    b2 = b.reshape(1, H).astype(jnp.float32)
    g2 = gamma.reshape(1, H).astype(jnp.float32)
    beta2 = beta.reshape(1, H).astype(jnp.float32)

    grid = (T_pad // tm_eff,)

    out = pl.pallas_call(
        bert_output_kernel,
        out_shape=jax.ShapeDtypeStruct((T_pad, H), out_dtype),
        grid_spec=pltpu.PrefetchScalarGridSpec(
            num_scalar_prefetch=0,
            grid=grid,
            in_specs=[
                pl.BlockSpec((tm_eff, K), lambda i: (i, 0)),  # x row tile
                pl.BlockSpec((K, H), lambda i: (0, 0)),        # weight (resident)
                pl.BlockSpec((1, H), lambda i: (0, 0)),        # bias
                pl.BlockSpec((tm_eff, H), lambda i: (i, 0)),   # residual tile
                pl.BlockSpec((1, H), lambda i: (0, 0)),        # gamma
                pl.BlockSpec((1, H), lambda i: (0, 0)),        # beta
            ],
            out_specs=pl.BlockSpec((tm_eff, H), lambda i: (i, 0)),
        ),
        compiler_params=pltpu.CompilerParams(
            dimension_semantics=("parallel",),
            vmem_limit_bytes=vmem_limit,
        ),
    )(hidden_states, w, b2, input_tensor, g2, beta2)

    if T_pad != T:
        out = out[:T]
    return out


if __name__ == "__main__":
    # Small config: batch=2, seq=8, hidden=32, intermediate=64
    batch, seq = 2, 8
    hidden_size, intermediate_size = 32, 64
    T = batch * seq

    key = jax.random.PRNGKey(0)
    k_x, k_res, k_w, k_b = jax.random.split(key, 4)

    hidden_states = jax.random.normal(k_x, (T, intermediate_size), jnp.float32)
    input_tensor = jax.random.normal(k_res, (T, hidden_size), jnp.float32)

    # Deterministic parameter init (nn.Linear-like scale)
    w = jax.random.normal(k_w, (intermediate_size, hidden_size), jnp.float32) * 0.02
    b = jax.random.normal(k_b, (hidden_size,), jnp.float32) * 0.02
    gamma = jnp.ones((hidden_size,), jnp.float32)   # LayerNorm weight
    beta = jnp.zeros((hidden_size,), jnp.float32)   # LayerNorm bias

    # Reference in plain JAX (PyTorch BertOutput semantics, eval-mode dropout)
    h_ref = hidden_states @ w + b + input_tensor
    mu = h_ref.mean(-1, keepdims=True)
    var = ((h_ref - mu) ** 2).mean(-1, keepdims=True)
    ref = (h_ref - mu) / jnp.sqrt(var + 1e-12) * gamma + beta

    # f32 path (strict check)
    out = bert_output(hidden_states, input_tensor, w, b, gamma, beta)
    out = jax.block_until_ready(out)
    assert jnp.allclose(out, ref, atol=1e-4, rtol=1e-4), "f32 mismatch vs reference"

    # bf16-MXU path (the high-throughput config for real BERT shapes)
    out_bf16 = bert_output(hidden_states, input_tensor, w, b, gamma, beta,
                           matmul_dtype=jnp.bfloat16)
    out_bf16 = jax.block_until_ready(out_bf16)
    assert jnp.allclose(out_bf16, ref, atol=1e-1, rtol=1e-1), "bf16 mismatch vs reference"

    print("KERNEL_OK")
</pallas_src>

<mosaic_0001>
module attributes {stable_mosaic.version = 11 : i64} {
  func.func @bert_output_kernel(%arg0: i32, %arg1: memref<16x64xf32, #tpu.memory_space<vmem>>, %arg2: memref<64x32xf32, #tpu.memory_space<vmem>>, %arg3: memref<1x32xf32, #tpu.memory_space<vmem>>, %arg4: memref<16x32xf32, #tpu.memory_space<vmem>>, %arg5: memref<1x32xf32, #tpu.memory_space<vmem>>, %arg6: memref<1x32xf32, #tpu.memory_space<vmem>>, %arg7: memref<16x32xf32, #tpu.memory_space<vmem>>) attributes {dimension_semantics = [#tpu.dimension_semantics<parallel>], iteration_bounds = array<i64: 1>, scalar_prefetch = 0 : i64, scratch_operands = 0 : i64, tpu.core_type = #tpu.core_type<tc>, window_params = [{transform_indices = @transform_0, window_bounds = array<i64: 16, 64>}, {pipeline_mode = #tpu.pipeline_mode<synchronous>, transform_indices = @transform_1, window_bounds = array<i64: 64, 32>}, {pipeline_mode = #tpu.pipeline_mode<synchronous>, transform_indices = @transform_2, window_bounds = array<i64: 1, 32>}, {transform_indices = @transform_3, window_bounds = array<i64: 16, 32>}, {pipeline_mode = #tpu.pipeline_mode<synchronous>, transform_indices = @transform_4, window_bounds = array<i64: 1, 32>}, {pipeline_mode = #tpu.pipeline_mode<synchronous>, transform_indices = @transform_5, window_bounds = array<i64: 1, 32>}, {transform_indices = @transform_6, window_bounds = array<i64: 16, 32>}]} {
    %c0 = arith.constant 0 : index
    %c0_0 = arith.constant 0 : index
    %0 = vector.load %arg1[%c0, %c0_0] : memref<16x64xf32, #tpu.memory_space<vmem>>, vector<16x64xf32>
    %c0_1 = arith.constant 0 : index
    %c0_2 = arith.constant 0 : index
    %1 = vector.load %arg2[%c0_1, %c0_2] : memref<64x32xf32, #tpu.memory_space<vmem>>, vector<64x32xf32>
    %cst = arith.constant dense<0.000000e+00> : vector<16x32xf32>
    %2 = tpu.matmul %0, %1, %cst {dimension_numbers = #tpu.dot_dimension_numbers<[1], [0], [0], [1], [0, 0, 1, 1], [], []>} : vector<16x64xf32>, vector<64x32xf32>, vector<16x32xf32> -> vector<16x32xf32>
    %c0_3 = arith.constant 0 : index
    %c0_4 = arith.constant 0 : index
    %3 = vector.load %arg3[%c0_3, %c0_4] : memref<1x32xf32, #tpu.memory_space<vmem>>, vector<1x32xf32>
    %4 = vector.broadcast %3 : vector<1x32xf32> to vector<16x32xf32>
    %5 = arith.addf %2, %4 : vector<16x32xf32>
    %c0_5 = arith.constant 0 : index
    %c0_6 = arith.constant 0 : index
    %6 = vector.load %arg4[%c0_5, %c0_6] : memref<16x32xf32, #tpu.memory_space<vmem>>, vector<16x32xf32>
    %7 = arith.addf %5, %6 : vector<16x32xf32>
    %cst_7 = arith.constant dense<0.000000e+00> : vector<16xf32>
    %8 = vector.multi_reduction <add>, %7, %cst_7 [1] : vector<16x32xf32> to vector<16xf32>
    %9 = vector.shape_cast %8 : vector<16xf32> to vector<16x1xf32>
    %cst_8 = arith.constant 3.200000e+01 : f32
    %10 = vector.broadcast %cst_8 : f32 to vector<16x1xf32>
    %11 = arith.divf %9, %10 : vector<16x1xf32>
    %12 = vector.broadcast %11 : vector<16x1xf32> to vector<16x32xf32>
    %13 = arith.subf %7, %12 : vector<16x32xf32>
    %14 = arith.mulf %13, %13 : vector<16x32xf32>
    %cst_9 = arith.constant dense<0.000000e+00> : vector<16xf32>
    %15 = vector.multi_reduction <add>, %14, %cst_9 [1] : vector<16x32xf32> to vector<16xf32>
    %16 = vector.shape_cast %15 : vector<16xf32> to vector<16x1xf32>
    %cst_10 = arith.constant 3.200000e+01 : f32
    %17 = vector.broadcast %cst_10 : f32 to vector<16x1xf32>
    %18 = arith.divf %16, %17 : vector<16x1xf32>
    %cst_11 = arith.constant 9.99999996E-13 : f32
    %19 = vector.broadcast %cst_11 : f32 to vector<16x1xf32>
    %20 = arith.addf %18, %19 : vector<16x1xf32>
    %21 = math.rsqrt %20 : vector<16x1xf32>
    %22 = vector.broadcast %21 : vector<16x1xf32> to vector<16x32xf32>
    %23 = arith.mulf %13, %22 : vector<16x32xf32>
    %c0_12 = arith.constant 0 : index
    %c0_13 = arith.constant 0 : index
    %24 = vector.load %arg5[%c0_12, %c0_13] : memref<1x32xf32, #tpu.memory_space<vmem>>, vector<1x32xf32>
    %25 = vector.broadcast %24 : vector<1x32xf32> to vector<16x32xf32>
    %26 = arith.mulf %23, %25 : vector<16x32xf32>
    %c0_14 = arith.constant 0 : index
    %c0_15 = arith.constant 0 : index
    %27 = vector.load %arg6[%c0_14, %c0_15] : memref<1x32xf32, #tpu.memory_space<vmem>>, vector<1x32xf32>
    %28 = vector.broadcast %27 : vector<1x32xf32> to vector<16x32xf32>
    %29 = arith.addf %26, %28 : vector<16x32xf32>
    %c0_16 = arith.constant 0 : index
    %c0_17 = arith.constant 0 : index
    %30 = vector.load %arg7[%c0_16, %c0_17] : memref<16x32xf32, #tpu.memory_space<vmem>>, vector<16x32xf32>
    tpu.vector_store %arg7[%c0_16, %c0_17], %29 {strides = array<i32>} : memref<16x32xf32, #tpu.memory_space<vmem>>, vector<16x32xf32>,
    return
  }
  func.func @transform_0(%arg0: i32) -> (i32, i32) {
    %c0_i32 = arith.constant 0 : i32
    %c0_i32_0 = arith.constant 0 : i32
    return %arg0, %c0_i32 : i32, i32
  }
  func.func @transform_1(%arg0: i32) -> (i32, i32) {
    %c0_i32 = arith.constant 0 : i32
    %c0_i32_0 = arith.constant 0 : i32
    %c0_i32_1 = arith.constant 0 : i32
    return %c0_i32, %c0_i32_0 : i32, i32
  }
  func.func @transform_2(%arg0: i32) -> (i32, i32) {
    %c0_i32 = arith.constant 0 : i32
    %c0_i32_0 = arith.constant 0 : i32
    %c0_i32_1 = arith.constant 0 : i32
    return %c0_i32, %c0_i32_0 : i32, i32
  }
  func.func @transform_3(%arg0: i32) -> (i32, i32) {
    %c0_i32 = arith.constant 0 : i32
    %c0_i32_0 = arith.constant 0 : i32
    return %arg0, %c0_i32 : i32, i32
  }
  func.func @transform_4(%arg0: i32) -> (i32, i32) {
    %c0_i32 = arith.constant 0 : i32
    %c0_i32_0 = arith.constant 0 : i32
    %c0_i32_1 = arith.constant 0 : i32
    return %c0_i32, %c0_i32_0 : i32, i32
  }
  func.func @transform_5(%arg0: i32) -> (i32, i32) {
    %c0_i32 = arith.constant 0 : i32
    %c0_i32_0 = arith.constant 0 : i32
    %c0_i32_1 = arith.constant 0 : i32
    return %c0_i32, %c0_i32_0 : i32, i32
  }
  func.func @transform_6(%arg0: i32) -> (i32, i32) {
    %c0_i32 = arith.constant 0 : i32
    %c0_i32_0 = arith.constant 0 : i32
    return %arg0, %c0_i32 : i32, i32
  }
}

</mosaic_0001>

<llo_original>
// kernel: tpu_custom_call.1
$region0: #{tpu_custom_call.1}
  #allocation0 [shape = 'u32[]', space=smem, size = 0x4, offset = 0x4, fixed_abs, tag = 'smem constant byte address 0x4 - core index']
  #allocation1 [shape = 'u32[72,128]{1,0:T(1,128)}', space=vmem, size = 0x9000, scoped, tag = 'internal scratch']
  %s0 = inlined_call_operand.vmem [shape: f32[16,64], index: 0, kind: input, shape index: {}]
  %s1 = inlined_call_operand.vmem [shape: f32[64,32], index: 1, kind: input, shape index: {}]
  %s2 = inlined_call_operand.vmem [shape: f32[1,32], index: 2, kind: input, shape index: {}]
  %s3 = inlined_call_operand.vmem [shape: f32[16,32], index: 3, kind: input, shape index: {}]
  %s4 = inlined_call_operand.vmem [shape: f32[1,32], index: 4, kind: input, shape index: {}]
  %s5 = inlined_call_operand.vmem [shape: f32[1,32], index: 5, kind: input, shape index: {}]
  %s6 = inlined_call_operand.hbm [shape: f32[16,32], index: 6, kind: output, shape index: {}]
  %s7 = sld [smem:[#allocation0]]
  $region34: #{tpu_custom_call.1} parent=0
    _
  %s9 = ssub.s32 1, %s7
  %s10 = scalar_select 0, %s9, %s7
  $region1: #{tpu_custom_call.1} parent=0
    #allocation2 [shape = 'u8[8192]{0}', space=vmem, size = 0x2000, scoped, tag = 'output window, operand 0, single buffered']
    #allocation3 [shape = 's32[1]{0}', space=sflag, size = 0x4, scoped, tag = 'scoped memory for tpu_custom_call.1']
    %11 = vsyncpa [#allocation3], 0
    // Predicated region
    $region2: #{tpu_custom_call.1} parent=1 // pred_check
      _
    $region3: #{tpu_custom_call.1} parent=1 // pred_check_branch
      %13 = sbr.rel (0) target = $region5
    $region4: #{tpu_custom_call.1} parent=1 // pred_region
      _
    $region5: #{tpu_custom_call.1} parent=1 // pred_fallthru
      _
    // Predicated region
    $region6: #{tpu_custom_call.1} parent=1 // pred_check
      _
    $region7: #{tpu_custom_call.1} parent=1 // pred_check_branch
      %15 = sbr.rel (0) target = $region9
    $region8: #{tpu_custom_call.1} parent=1 // pred_region
      _
    $region9: #{tpu_custom_call.1} parent=1 // pred_fallthru
      _
    // Predicated region
    $region10: #{tpu_custom_call.1} parent=1 // pred_check
      _
    $region11: #{tpu_custom_call.1} parent=1 // pred_check_branch
      %17 = sbr.rel (0) target = $region13
    $region12: #{tpu_custom_call.1} parent=1 // pred_region
      _
    $region13: #{tpu_custom_call.1} parent=1 // pred_fallthru
      _
    // Predicated region
    $region14: #{tpu_custom_call.1} parent=1 // pred_check
      _
    $region15: #{tpu_custom_call.1} parent=1 // pred_check_branch
      %19 = sbr.rel (0) target = $region17
    $region16: #{tpu_custom_call.1} parent=1 // pred_region
      _
    $region17: #{tpu_custom_call.1} parent=1 // pred_fallthru
      _
    // Predicated region
    $region18: #{tpu_custom_call.1} parent=1 // pred_check
      _
    $region19: #{tpu_custom_call.1} parent=1 // pred_check_branch
      %21 = sbr.rel (0) target = $region21
    $region20: #{tpu_custom_call.1} parent=1 // pred_region
      _
    $region21: #{tpu_custom_call.1} parent=1 // pred_fallthru
      _
    // Predicated region
    $region22: #{tpu_custom_call.1} parent=1 // pred_check
      _
    $region23: #{tpu_custom_call.1} parent=1 // pred_check_branch
      %23 = sbr.rel (0) target = $region25
    $region24: #{tpu_custom_call.1} parent=1 // pred_region
      _
    $region25: #{tpu_custom_call.1} parent=1 // pred_fallthru
      _
    %v24 = vld [vmem:[%s0] sm:$0xff]
    %v25 = vld [vmem:[%s0 + $0x8] sm:$0xff]
    %v26 = vld [vmem:[%s1] sm:$0xff]
    %v27 = vld [vmem:[%s1 + $0x8] sm:$0xff]
    %v28 = vld [vmem:[%s1 + $0x10] sm:$0xff]
    %v29 = vld [vmem:[%s1 + $0x18] sm:$0xff]
    %v30 = vld [vmem:[%s1 + $0x20] sm:$0xff]
    %v31 = vld [vmem:[%s1 + $0x28] sm:$0xff]
    %v32 = vld [vmem:[%s1 + $0x30] sm:$0xff]
    %v33 = vld [vmem:[%s1 + $0x38] sm:$0xff]
    %v34 = vld [vmem:[%s2] sm:$0x1]
    %v36 = vperm.slane %v34, 0
    %vm38 = vcmask 523264
    %v40 = vsel %vm38, %v24, 0
    %v43 = vsel %vm38, %v25, 0
    %45 = vmatpush.msra.mxu0 0.0
    %46 = vmatpush.msra.mxu0 0.0
    %47 = vmatpush.msra.mxu0 0.0
    %48 = vmatpush.msra.mxu0 0.0
    %49 = vmatpush.msra.mxu0 0.0
    %50 = vmatpush.msra.mxu0 0.0
    %51 = vmatpush.msra.mxu0 0.0
    %52 = vmatpush.msra.mxu0 0.0
    %53 = vmatpush.msra.mxu0 %v33
    %54 = vmatpush.msra.mxu0 %v32
    %55 = vmatpush.msra.mxu0 %v31
    %56 = vmatpush.msra.mxu0 %v30
    %57 = vmatpush.msra.mxu0 %v29
    %58 = vmatpush.msra.mxu0 %v28
    %59 = vmatpush.msra.mxu0 %v27
    %60 = vmatpush.msra.mxu0 %v26
    %61 = vmatmul.f32.gmra.mxu0 %v40
    %v62 = vpop.f32.mrf.mxu0
    %v63 = vadd.f32 %v36, %v62
    %64 = vmatmul.f32.gmra.mxu0 %v43
    %v65 = vpop.f32.mrf.mxu0
    %v66 = vadd.f32 %v36, %v65
    %67 = vdwg.mxu0
    %v68 = vld [vmem:[%s3] sm:$0xff]
    %v69 = vld [vmem:[%s3 + $0x8] sm:$0xff]
    %v70 = vadd.f32 %v63, %v68
    %v71 = vadd.f32 %v66, %v69
    %vm72 = vcmask 261120
    %v73 = vsel %vm72, %v70, 0.0
    %74 = vadd.xlane.f32.xlu0 %v73
    %v75 = vpop.xlane.xlu0 %74
    %v76 = vsel %vm72, %v71, 0.0
    %77 = vadd.xlane.f32.xlu0 %v76
    %v78 = vpop.xlane.xlu0 %77
    %v79 = vrcp.pop 32.0
    %v80 = vmul.f32 32.0, %v79
    %v81 = vsub.f32 1.0, %v80
    %v82 = vmul.f32 %v79, %v81
    %v83 = vadd.f32 %v79, %v82
    %vm84 = vweird.f32 %v79
    %v85 = vsel %vm84, %v79, %v83
    %v86 = vmul.f32 %v75, %v85
    %v87 = vmul.f32 %v78, %v85
    %v88 = vsub.f32 %v70, %v86
    %v89 = vsub.f32 %v71, %v87
    %v90 = vmul.f32 %v88, %v88
    %v91 = vmul.f32 %v89, %v89
    %v92 = vsel %vm72, %v90, 0.0
    %93 = vadd.xlane.f32.xlu0 %v92
    %v94 = vpop.xlane.xlu0 %93
    %v95 = vsel %vm72, %v91, 0.0
    %96 = vadd.xlane.f32.xlu0 %v95
    %v97 = vpop.xlane.xlu0 %96
    %v98 = vmul.f32 %v94, %v85
    %v99 = vmul.f32 %v97, %v85
    %v100 = vadd.f32 %v98, 1e-12
    %v101 = vadd.f32 %v99, 1e-12
    %v102 = vrsqrt.pop %v100
    %v103 = vmul.f32 %v102, %v100
    %v104 = vmul.f32 %v103, %v102
    %v105 = vmul.f32 0.5, %v104
    %v106 = vsub.f32 1.5, %v105
    %v107 = vmul.f32 %v102, %v106
    %vm108 = vweird.f32 %v100
    %vm109 = vweird.f32 %v102
    %vm110 = vmor %vm108, %vm109
    %v111 = vsel %vm110, %v102, %v107
    %v112 = vrsqrt.pop %v101
    %v113 = vmul.f32 %v112, %v101
    %v114 = vmul.f32 %v113, %v112
    %v115 = vmul.f32 0.5, %v114
    %v116 = vsub.f32 1.5, %v115
    %v117 = vmul.f32 %v112, %v116
    %vm118 = vweird.f32 %v101
    %vm119 = vweird.f32 %v112
    %vm120 = vmor %vm118, %vm119
    %v121 = vsel %vm120, %v112, %v117
    %v122 = vmul.f32 %v88, %v111
    %v123 = vmul.f32 %v89, %v121
    %v124 = vld [vmem:[%s4] sm:$0x1]
    %v126 = vperm.slane %v124, 0
    %v128 = vmul.f32 %v122, %v126
    %v129 = vmul.f32 %v123, %v126
    %v130 = vld [vmem:[%s5] sm:$0x1]
    %v132 = vperm.slane %v130, 0
    %v134 = vadd.f32 %v128, %v132
    %v135 = vadd.f32 %v129, %v132
    %136 = vst.msk [vmem:[#allocation2] sm:$0xff] %vm72, %v134
    %137 = vst.msk [vmem:[#allocation2 + $0x8] sm:$0xff] %vm72, %v135
    // Predicated region
    $region26: #{tpu_custom_call.1} parent=1 // pred_check
      _
    $region27: #{tpu_custom_call.1} parent=1 // pred_check_branch
      %139 = sbr.rel (0) target = $region29
    $region28: #{tpu_custom_call.1} parent=1 // pred_region
      %141 = vsyncadd [#allocation3], 0
      %s142 = sshll.u32 [#allocation2], 4
      %s143 = int_to_ptr.vmem [resolvable:$true] %s142
      %s144 = sshll.u32 %s6, 4
      %s145 = int_to_ptr.hbm [resolvable:$true] %s144
      %150 = dma.vmem_to_hbm [thread:$0]  %s143, 256, %s145, [#allocation3], 128, 128, 8
    $region29: #{tpu_custom_call.1} parent=1 // pred_fallthru
      _
    // Predicated region
    $region30: #{tpu_custom_call.1} parent=1 // pred_check
      _
    $region31: #{tpu_custom_call.1} parent=1 // pred_check_branch
      %152 = sbr.rel (0) target = $region33
    $region32: #{tpu_custom_call.1} parent=1 // pred_region
      %154 = dma.done [#allocation3], 256
    $region33: #{tpu_custom_call.1} parent=1 // pred_fallthru
      _
    %155 = vsyncpa [#allocation3], 1

</llo_original>
